<compile_context>
chip_gen: v6e
topology: v6e:2x2x1
jax: 0.10.0
libtpu: 0.0.40
codegen_flags: <defaults>
</compile_context>

<pallas_src>
import functools

import jax
import jax.numpy as jnp
from jax.experimental import pallas as pl
from jax.experimental.pallas import tpu as pltpu


def mlp_kernel(*refs, num_layers, project, use_ln, compute_dtype, eps=1e-5):
    """One grid step: (ROW_BLOCK, D0) rows through the whole MLP."""
    x_ref = refs[0]
    w_refs = refs[1:1 + num_layers]
    idx = 1 + num_layers
    if use_ln:
        g_ref, b_ref = refs[idx], refs[idx + 1]
        idx += 2
    o_ref = refs[idx]

    h = x_ref[...]                                     # (TM, D0), compute_dtype
    for i in range(num_layers):
        y = jnp.dot(h, w_refs[i][...],
                    preferred_element_type=jnp.float32)     # MXU, f32 accum
        if project:
            y = jnp.maximum(y, 0.0)                          # ReLU (nn.ReLU)
        # keep intermediates in the compute dtype for the next MXU pass,
        # keep the final layer's result in f32 for the LayerNorm / store.
        h = y.astype(compute_dtype) if i < num_layers - 1 else y

    if use_ln:
        # PyTorch nn.LayerNorm: biased variance over last dim, eps=1e-5.
        mu = jnp.mean(h, axis=-1, keepdims=True)
        var = jnp.mean((h - mu) ** 2, axis=-1, keepdims=True)
        h = (h - mu) * jax.lax.rsqrt(var + eps) * g_ref[...] + b_ref[...]

    o_ref[...] = h.astype(o_ref.dtype)


def mlp_forward(x, weights, gamma=None, beta=None, *, project=True,
                row_block=128, compute_dtype=jnp.bfloat16):
    """x: (M, D0).  weights[i]: (dims[i], dims[i+1]) (i.e. y = x @ W).

    Matches MLP(demensions=dims, bias=False, dropout=0.0, project=project,
    ln=(gamma is not None)) in eval mode.
    """
    M, D0 = x.shape
    num_layers = len(weights)
    d_out = weights[-1].shape[1]
    use_ln = gamma is not None

    x_c = x.astype(compute_dtype)
    w_c = [w.astype(compute_dtype) for w in weights]

    # Pad rows to a multiple of the row block (cheap; sliced off afterwards).
    pad = (-M) % row_block
    if pad:
        x_c = jnp.pad(x_c, ((0, pad), (0, 0)))
    m_padded = M + pad
    grid = (m_padded // row_block,)

    in_specs = [pl.BlockSpec((row_block, D0), lambda i: (i, 0))]
    extra_args = []
    for w in w_c:
        din, dout = w.shape
        # Full-array block, constant index map -> weight stays resident.
        in_specs.append(pl.BlockSpec((din, dout), lambda i: (0, 0)))
    if use_ln:
        in_specs.append(pl.BlockSpec((1, d_out), lambda i: (0, 0)))
        in_specs.append(pl.BlockSpec((1, d_out), lambda i: (0, 0)))
        extra_args = [gamma.reshape(1, d_out).astype(jnp.float32),
                      beta.reshape(1, d_out).astype(jnp.float32)]

    kernel = functools.partial(mlp_kernel,
                               num_layers=num_layers,
                               project=project,
                               use_ln=use_ln,
                               compute_dtype=compute_dtype)

    out = pl.pallas_call(
        kernel,
        out_shape=jax.ShapeDtypeStruct((m_padded, d_out), jnp.float32),
        grid_spec=pltpu.PrefetchScalarGridSpec(
            num_scalar_prefetch=0,
            grid=grid,
            in_specs=in_specs,
            out_specs=pl.BlockSpec((row_block, d_out), lambda i: (i, 0)),
        ),
        compiler_params=pltpu.CompilerParams(
            dimension_semantics=("parallel",),
            vmem_limit_bytes=32 * 1024 * 1024,
        ),
    )(x_c, *w_c, *extra_args)

    if pad:
        out = out[:M]
    return out


def ref_mlp(x, weights, gamma=None, beta=None, *, project=True,
            compute_dtype=jnp.bfloat16):
    """Pure-JAX reference mirroring the PyTorch forward (same dtype path)."""
    h = x.astype(compute_dtype)
    for i, w in enumerate(weights):
        y = jnp.dot(h, w.astype(compute_dtype),
                    preferred_element_type=jnp.float32)
        if project:
            y = jnp.maximum(y, 0.0)
        h = y.astype(compute_dtype) if i < len(weights) - 1 else y
    if gamma is not None:
        mu = h.mean(-1, keepdims=True)
        var = ((h - mu) ** 2).mean(-1, keepdims=True)
        h = (h - mu) / jnp.sqrt(var + 1e-5) * gamma + beta
    return h.astype(jnp.float32)


if __name__ == "__main__":
    # Small shapes, chosen so feature dims are lane-dense (multiples of 128)
    # and the row grid has an even number of 128-row steps.
    dims = (128, 256, 128)      # demensions
    M = 256                     # flattened (batch * tokens) rows
    use_ln = True               # MLP(..., ln=True); bias=False, project=True

    key = jax.random.PRNGKey(0)
    ks = jax.random.split(key, len(dims) + 3)
    f32 = jnp.float32

    weights = [
        jax.random.normal(ks[i], (dims[i], dims[i + 1]), f32) * 0.05
        for i in range(len(dims) - 1)
    ]
    gamma = 1.0 + jax.random.normal(ks[-3], (dims[-1],), f32) * 0.02
    beta = jax.random.normal(ks[-2], (dims[-1],), f32) * 0.02
    x = jax.random.normal(ks[-1], (M, dims[0]), f32)

    out = mlp_forward(x, weights, gamma if use_ln else None,
                      beta if use_ln else None, project=True)
    out = jax.block_until_ready(out)

    ref = ref_mlp(x, weights, gamma if use_ln else None,
                  beta if use_ln else None, project=True)

    assert out.shape == (M, dims[-1])
    max_err = float(jnp.max(jnp.abs(out - ref)))
    assert jnp.allclose(out, ref, atol=1e-2, rtol=1e-2), max_err

    print("KERNEL_OK")
</pallas_src>

<mosaic_0001>
module attributes {stable_mosaic.version = 11 : i64} {
  func.func @mlp_kernel(%arg0: i32, %arg1: memref<128x128xbf16, #tpu.memory_space<vmem>>, %arg2: memref<128x256xbf16, #tpu.memory_space<vmem>>, %arg3: memref<256x128xbf16, #tpu.memory_space<vmem>>, %arg4: memref<1x128xf32, #tpu.memory_space<vmem>>, %arg5: memref<1x128xf32, #tpu.memory_space<vmem>>, %arg6: memref<128x128xf32, #tpu.memory_space<vmem>>) attributes {dimension_semantics = [#tpu.dimension_semantics<parallel>], iteration_bounds = array<i64: 2>, scalar_prefetch = 0 : i64, scratch_operands = 0 : i64, tpu.core_type = #tpu.core_type<tc>, window_params = [{transform_indices = @transform_0, window_bounds = array<i64: 128, 128>}, {pipeline_mode = #tpu.pipeline_mode<synchronous>, transform_indices = @transform_1, window_bounds = array<i64: 128, 256>}, {pipeline_mode = #tpu.pipeline_mode<synchronous>, transform_indices = @transform_2, window_bounds = array<i64: 256, 128>}, {pipeline_mode = #tpu.pipeline_mode<synchronous>, transform_indices = @transform_3, window_bounds = array<i64: 1, 128>}, {pipeline_mode = #tpu.pipeline_mode<synchronous>, transform_indices = @transform_4, window_bounds = array<i64: 1, 128>}, {transform_indices = @transform_5, window_bounds = array<i64: 128, 128>}]} {
    %c0 = arith.constant 0 : index
    %c0_0 = arith.constant 0 : index
    %0 = vector.load %arg1[%c0, %c0_0] : memref<128x128xbf16, #tpu.memory_space<vmem>>, vector<128x128xbf16>
    %c0_1 = arith.constant 0 : index
    %c0_2 = arith.constant 0 : index
    %1 = vector.load %arg2[%c0_1, %c0_2] : memref<128x256xbf16, #tpu.memory_space<vmem>>, vector<128x256xbf16>
    %cst = arith.constant dense<0.000000e+00> : vector<128x256xf32>
    %2 = tpu.matmul %0, %1, %cst {dimension_numbers = #tpu.dot_dimension_numbers<[1], [0], [0], [1], [0, 0, 1, 1], [], []>} : vector<128x128xbf16>, vector<128x256xbf16>, vector<128x256xf32> -> vector<128x256xf32>
    %cst_3 = arith.constant 0.000000e+00 : f32
    %3 = vector.broadcast %cst_3 : f32 to vector<128x256xf32>
    %4 = arith.maximumf %2, %3 : vector<128x256xf32>
    %5 = arith.truncf %4 : vector<128x256xf32> to vector<128x256xbf16>
    %c0_4 = arith.constant 0 : index
    %c0_5 = arith.constant 0 : index
    %6 = vector.load %arg3[%c0_4, %c0_5] : memref<256x128xbf16, #tpu.memory_space<vmem>>, vector<256x128xbf16>
    %cst_6 = arith.constant dense<0.000000e+00> : vector<128x128xf32>
    %7 = tpu.matmul %5, %6, %cst_6 {dimension_numbers = #tpu.dot_dimension_numbers<[1], [0], [0], [1], [0, 0, 1, 1], [], []>} : vector<128x256xbf16>, vector<256x128xbf16>, vector<128x128xf32> -> vector<128x128xf32>
    %cst_7 = arith.constant 0.000000e+00 : f32
    %8 = vector.broadcast %cst_7 : f32 to vector<128x128xf32>
    %9 = arith.maximumf %7, %8 : vector<128x128xf32>
    %cst_8 = arith.constant dense<0.000000e+00> : vector<128xf32>
    %10 = vector.multi_reduction <add>, %9, %cst_8 [1] : vector<128x128xf32> to vector<128xf32>
    %11 = vector.shape_cast %10 : vector<128xf32> to vector<128x1xf32>
    %cst_9 = arith.constant 1.280000e+02 : f32
    %12 = vector.broadcast %cst_9 : f32 to vector<128x1xf32>
    %13 = arith.divf %11, %12 : vector<128x1xf32>
    %14 = vector.broadcast %13 : vector<128x1xf32> to vector<128x128xf32>
    %15 = arith.subf %9, %14 : vector<128x128xf32>
    %16 = arith.mulf %15, %15 : vector<128x128xf32>
    %cst_10 = arith.constant dense<0.000000e+00> : vector<128xf32>
    %17 = vector.multi_reduction <add>, %16, %cst_10 [1] : vector<128x128xf32> to vector<128xf32>
    %18 = vector.shape_cast %17 : vector<128xf32> to vector<128x1xf32>
    %cst_11 = arith.constant 1.280000e+02 : f32
    %19 = vector.broadcast %cst_11 : f32 to vector<128x1xf32>
    %20 = arith.divf %18, %19 : vector<128x1xf32>
    %21 = vector.broadcast %13 : vector<128x1xf32> to vector<128x128xf32>
    %22 = arith.subf %9, %21 : vector<128x128xf32>
    %cst_12 = arith.constant 9.99999974E-6 : f32
    %23 = vector.broadcast %cst_12 : f32 to vector<128x1xf32>
    %24 = arith.addf %20, %23 : vector<128x1xf32>
    %25 = math.rsqrt %24 : vector<128x1xf32>
    %26 = vector.broadcast %25 : vector<128x1xf32> to vector<128x128xf32>
    %27 = arith.mulf %22, %26 : vector<128x128xf32>
    %c0_13 = arith.constant 0 : index
    %c0_14 = arith.constant 0 : index
    %28 = vector.load %arg4[%c0_13, %c0_14] : memref<1x128xf32, #tpu.memory_space<vmem>>, vector<1x128xf32>
    %29 = vector.broadcast %28 : vector<1x128xf32> to vector<128x128xf32>
    %30 = arith.mulf %27, %29 : vector<128x128xf32>
    %c0_15 = arith.constant 0 : index
    %c0_16 = arith.constant 0 : index
    %31 = vector.load %arg5[%c0_15, %c0_16] : memref<1x128xf32, #tpu.memory_space<vmem>>, vector<1x128xf32>
    %32 = vector.broadcast %31 : vector<1x128xf32> to vector<128x128xf32>
    %33 = arith.addf %30, %32 : vector<128x128xf32>
    %c0_17 = arith.constant 0 : index
    %c0_18 = arith.constant 0 : index
    %34 = vector.load %arg6[%c0_17, %c0_18] : memref<128x128xf32, #tpu.memory_space<vmem>>, vector<128x128xf32>
    tpu.vector_store %arg6[%c0_17, %c0_18], %33 {strides = array<i32>} : memref<128x128xf32, #tpu.memory_space<vmem>>, vector<128x128xf32>,
    return
  }
  func.func @transform_0(%arg0: i32) -> (i32, i32) {
    %c0_i32 = arith.constant 0 : i32
    %c0_i32_0 = arith.constant 0 : i32
    return %arg0, %c0_i32 : i32, i32
  }
  func.func @transform_1(%arg0: i32) -> (i32, i32) {
    %c0_i32 = arith.constant 0 : i32
    %c0_i32_0 = arith.constant 0 : i32
    %c0_i32_1 = arith.constant 0 : i32
    return %c0_i32, %c0_i32_0 : i32, i32
  }
  func.func @transform_2(%arg0: i32) -> (i32, i32) {
    %c0_i32 = arith.constant 0 : i32
    %c0_i32_0 = arith.constant 0 : i32
    %c0_i32_1 = arith.constant 0 : i32
    return %c0_i32, %c0_i32_0 : i32, i32
  }
  func.func @transform_3(%arg0: i32) -> (i32, i32) {
    %c0_i32 = arith.constant 0 : i32
    %c0_i32_0 = arith.constant 0 : i32
    %c0_i32_1 = arith.constant 0 : i32
    return %c0_i32, %c0_i32_0 : i32, i32
  }
  func.func @transform_4(%arg0: i32) -> (i32, i32) {
    %c0_i32 = arith.constant 0 : i32
    %c0_i32_0 = arith.constant 0 : i32
    %c0_i32_1 = arith.constant 0 : i32
    return %c0_i32, %c0_i32_0 : i32, i32
  }
  func.func @transform_5(%arg0: i32) -> (i32, i32) {
    %c0_i32 = arith.constant 0 : i32
    %c0_i32_0 = arith.constant 0 : i32
    return %arg0, %c0_i32 : i32, i32
  }
}

</mosaic_0001>

<llo_original>
// kernel: tpu_custom_call.1
$region0: #{tpu_custom_call.1}
  #allocation0 [shape = 'u32[]', space=smem, size = 0x4, offset = 0x4, fixed_abs, tag = 'smem constant byte address 0x4 - core index']
  #allocation1 [shape = 'u32[144,128]{1,0:T(1,128)}', space=vmem, size = 0x12000, scoped, tag = 'internal scratch']
  %s0 = inlined_call_operand.hbm [shape: bf16[256,128], index: 0, kind: input, shape index: {}]
  %s1 = inlined_call_operand.hbm [shape: bf16[128,256], index: 1, kind: input, shape index: {}]
  %s2 = inlined_call_operand.hbm [shape: bf16[256,128], index: 2, kind: input, shape index: {}]
  %s3 = inlined_call_operand.vmem [shape: f32[1,128], index: 3, kind: input, shape index: {}]
  %s4 = inlined_call_operand.vmem [shape: f32[1,128], index: 4, kind: input, shape index: {}]
  %s5 = inlined_call_operand.hbm [shape: f32[256,128], index: 5, kind: output, shape index: {}]
  %s6 = sld [smem:[#allocation0]]
  $region65: #{tpu_custom_call.1} parent=0
    _
  %s8 = ssub.s32 1, %s6
  %s9 = scalar_select 0, %s8, %s6
  $region1: #{tpu_custom_call.1} parent=0
    #allocation2 [shape = 'u8[65536]{0}', space=vmem, size = 0x10000, scoped, tag = 'input window, operand 0']
    #allocation3 [shape = 's32[2]{0}', space=sflag, size = 0x8, scoped, tag = 'scoped memory for tpu_custom_call.1']
    #allocation4 [shape = 's32[2]{0}', space=sflag, size = 0x8, scoped, tag = 'scoped memory for tpu_custom_call.1']
    #allocation5 [shape = 'u8[65536]{0}', space=vmem, size = 0x10000, scoped, tag = 'input window, operand 1, single buffered']
    #allocation6 [shape = 's32[1]{0}', space=sflag, size = 0x4, scoped, tag = 'scoped memory for tpu_custom_call.1']
    #allocation7 [shape = 'u8[65536]{0}', space=vmem, size = 0x10000, scoped, tag = 'input window, operand 2, single buffered']
    #allocation8 [shape = 'u8[131072]{0}', space=vmem, size = 0x20000, scoped, tag = 'output window, operand 0']
    %10 = vsyncpa [#allocation3], 0
    %s11 = scalar_lea.sflag [#allocation3], 1
    %12 = vsyncpa %s11, 0
    %13 = vsyncpa [#allocation6], 0
    %14 = vsyncpa [#allocation4], 0
    %s15 = scalar_lea.sflag [#allocation4], 1
    %16 = vsyncpa %s15, 0
    loop: start=0, step=1, limit=4
    $region2: #{tpu_custom_call.1} parent=1 // loop_pre_header
      _
    $region3: #{tpu_custom_call.1} parent=1 // loop_header
      %s18 = sphi 0, %s22
      %p19 = scmp.ge.s32.totalorder %s18, 4
      %s28 = sphi 0, %s30
      %s31 = sphi 0, %s28
      %s32 = sphi 0, %s31
      %s48 = sphi 0, %s32
      %s52 = sphi 0, %s52
      %s54 = sphi 0, %s52
      %s55 = sphi 0, %s54
      %s69 = sphi 0, %s55
      %s73 = sphi 0, %s73
      %s75 = sphi 0, %s73
      %s76 = sphi 0, %s75
      %s90 = sphi 0, %s76
      %s94 = sphi 0, %s94
      %s96 = sphi 0, %s94
      %s97 = sphi 0, %s96
      %s111 = sphi 0, %s97
      %s115 = sphi 0, %s115
      %s117 = sphi 0, %s115
      %s118 = sphi 0, %s117
      %s132 = sphi 0, %s118
      %s138 = sphi 0, %s140
      %s141 = sphi 0, %s138
      %s142 = sphi 0, %s141
      %s158 = sphi 0, %s142
    $region4: #{tpu_custom_call.1} parent=1 // loop_header_branch
      %21 = sbr.rel (%p19) target = $region8
    $region5: #{tpu_custom_call.1} parent=1 // loop_body
      %s23 = ssub.s32 %s18, 1
      %s24 = ssub.s32 %s18, 2
      %s25 = sadd.s32 %s18, 1
      %s26 = ssub.s32 %s18, %s25
      %p27 = scmp.eq.s32.totalorder %s26, 0
      %s29 = sadd.s32 %s28, 1
      %s30 = scalar_select %p27, %s28, %s29
      %p33 = pneg %p27
      %p34 = scmp.eq.s32.totalorder %s18, 1
      %p35 = por %p33, %p34
      %p36 = scmp.ne.s32.totalorder %s28, %s31
      %p37 = scmp.eq.s32.totalorder %s18, 0
      %p38 = por %p36, %p37
      %p39 = scmp.ne.s32.totalorder %s28, %s31
      %p40 = scmp.eq.s32.totalorder %s23, 1
      %p41 = por %p39, %p40
      %p42 = scmp.ne.s32.totalorder %s31, %s32
      %p43 = scmp.eq.s32.totalorder %s23, 0
      %p44 = por %p42, %p43
      %p45 = scmp.ne.s32.totalorder %s31, %s32
      %p46 = scmp.eq.s32.totalorder %s24, 1
      %p47 = por %p45, %p46
      %p49 = scmp.ne.s32.totalorder %s32, %s48
      %p50 = scmp.eq.s32.totalorder %s24, 0
      %p51 = por %p49, %p50
      %s53 = sadd.s32 %s52, 1
      %p56 = scmp.eq.s32.totalorder %s18, 1
      %p57 = scmp.ne.s32.totalorder %s52, %s54
      %p58 = scmp.eq.s32.totalorder %s18, 0
      %p59 = por %p57, %p58
      %p60 = scmp.ne.s32.totalorder %s52, %s54
      %p61 = scmp.eq.s32.totalorder %s23, 1
      %p62 = por %p60, %p61
      %p63 = scmp.ne.s32.totalorder %s54, %s55
      %p64 = scmp.eq.s32.totalorder %s23, 0
      %p65 = por %p63, %p64
      %p66 = scmp.ne.s32.totalorder %s54, %s55
      %p67 = scmp.eq.s32.totalorder %s24, 1
      %p68 = por %p66, %p67
      %p70 = scmp.ne.s32.totalorder %s55, %s69
      %p71 = scmp.eq.s32.totalorder %s24, 0
      %p72 = por %p70, %p71
      %s74 = sadd.s32 %s73, 1
      %p77 = scmp.eq.s32.totalorder %s18, 1
      %p78 = scmp.ne.s32.totalorder %s73, %s75
      %p79 = scmp.eq.s32.totalorder %s18, 0
      %p80 = por %p78, %p79
      %p81 = scmp.ne.s32.totalorder %s73, %s75
      %p82 = scmp.eq.s32.totalorder %s23, 1
      %p83 = por %p81, %p82
      %p84 = scmp.ne.s32.totalorder %s75, %s76
      %p85 = scmp.eq.s32.totalorder %s23, 0
      %p86 = por %p84, %p85
      %p87 = scmp.ne.s32.totalorder %s75, %s76
      %p88 = scmp.eq.s32.totalorder %s24, 1
      %p89 = por %p87, %p88
      %p91 = scmp.ne.s32.totalorder %s76, %s90
      %p92 = scmp.eq.s32.totalorder %s24, 0
      %p93 = por %p91, %p92
      %s95 = sadd.s32 %s94, 1
      %p98 = scmp.eq.s32.totalorder %s18, 1
      %p99 = scmp.ne.s32.totalorder %s94, %s96
      %p100 = scmp.eq.s32.totalorder %s18, 0
      %p101 = por %p99, %p100
      %p102 = scmp.ne.s32.totalorder %s94, %s96
      %p103 = scmp.eq.s32.totalorder %s23, 1
      %p104 = por %p102, %p103
      %p105 = scmp.ne.s32.totalorder %s96, %s97
      %p106 = scmp.eq.s32.totalorder %s23, 0
      %p107 = por %p105, %p106
      %p108 = scmp.ne.s32.totalorder %s96, %s97
      %p109 = scmp.eq.s32.totalorder %s24, 1
      %p110 = por %p108, %p109
      %p112 = scmp.ne.s32.totalorder %s97, %s111
      %p113 = scmp.eq.s32.totalorder %s24, 0
      %p114 = por %p112, %p113
      %s116 = sadd.s32 %s115, 1
      %p119 = scmp.eq.s32.totalorder %s18, 1
      %p120 = scmp.ne.s32.totalorder %s115, %s117
      %p121 = scmp.eq.s32.totalorder %s18, 0
      %p122 = por %p120, %p121
      %p123 = scmp.ne.s32.totalorder %s115, %s117
      %p124 = scmp.eq.s32.totalorder %s23, 1
      %p125 = por %p123, %p124
      %p126 = scmp.ne.s32.totalorder %s117, %s118
      %p127 = scmp.eq.s32.totalorder %s23, 0
      %p128 = por %p126, %p127
      %p129 = scmp.ne.s32.totalorder %s117, %s118
      %p130 = scmp.eq.s32.totalorder %s24, 1
      %p131 = por %p129, %p130
      %p133 = scmp.ne.s32.totalorder %s118, %s132
      %p134 = scmp.eq.s32.totalorder %s24, 0
      %p135 = por %p133, %p134
      %s136 = ssub.s32 %s18, %s25
      %p137 = scmp.eq.s32.totalorder %s136, 0
      %s139 = sadd.s32 %s138, 1
      %s140 = scalar_select %p137, %s138, %s139
      %p143 = pneg %p137
      %p144 = scmp.eq.s32.totalorder %s18, 1
      %p145 = por %p143, %p144
      %p146 = scmp.ne.s32.totalorder %s138, %s141
      %p147 = scmp.eq.s32.totalorder %s18, 0
      %p148 = por %p146, %p147
      %p149 = scmp.ne.s32.totalorder %s138, %s141
      %p150 = scmp.eq.s32.totalorder %s23, 1
      %p151 = por %p149, %p150
      %p152 = scmp.ne.s32.totalorder %s141, %s142
      %p153 = scmp.eq.s32.totalorder %s23, 0
      %p154 = por %p152, %p153
      %p155 = scmp.ne.s32.totalorder %s141, %s142
      %p156 = scmp.eq.s32.totalorder %s24, 1
      %p157 = por %p155, %p156
      %p159 = scmp.ne.s32.totalorder %s142, %s158
      %p160 = scmp.eq.s32.totalorder %s24, 0
      %p161 = por %p159, %p160
      %p162 = scmp.le.s32.totalorder 1, %s18
      %p163 = scmp.lt.s32.totalorder %s18, 3
      %p164 = pnand %p162, %p163
      %p165 = pneg %p164
      // Predicated region
      $region9: #{tpu_custom_call.1} parent=5 // pred_check
        _
      $region10: #{tpu_custom_call.1} parent=5 // pred_check_branch
        %167 = sbr.rel (%p164) target = $region12
      $region11: #{tpu_custom_call.1} parent=5 // pred_region
        %s168 = ssub.s32 %s18, 1
        // Predicated region
        $region13: #{tpu_custom_call.1} parent=11 // pred_check
          %p169 = pneg %p65
        $region14: #{tpu_custom_call.1} parent=11 // pred_check_branch
          %171 = sbr.rel (%p169) target = $region16
        $region15: #{tpu_custom_call.1} parent=11 // pred_region
          %s173 = ssub.s32 2048, 2048
          %174 = vsyncadd [#allocation6], %s173
          %s175 = sshll.u32 [#allocation5], 4
          %s176 = int_to_ptr.vmem [resolvable:$true] %s175
          %181 = dma.hbm_to_vmem [thread:$0]  %s1, 2048, %s176, [#allocation6], 128, 128, 8
        $region16: #{tpu_custom_call.1} parent=11 // pred_fallthru
          _
        // Predicated region
        $region17: #{tpu_custom_call.1} parent=11 // pred_check
          %p182 = pneg %p86
        $region18: #{tpu_custom_call.1} parent=11 // pred_check_branch
          %184 = sbr.rel (%p182) target = $region20
        $region19: #{tpu_custom_call.1} parent=11 // pred_region
          %s186 = ssub.s32 2048, 2048
          %187 = vsyncadd [#allocation6], %s186
          %s188 = sshll.u32 [#allocation7], 4
          %s189 = int_to_ptr.vmem [resolvable:$true] %s188
          %194 = dma.hbm_to_vmem [thread:$0]  %s2, 2048, %s189, [#allocation6], 64, 64, 4
        $region20: #{tpu_custom_call.1} parent=11 // pred_fallthru
          _
        // Predicated region
        $region21: #{tpu_custom_call.1} parent=11 // pred_check
          %p195 = pneg %p107
        $region22: #{tpu_custom_call.1} parent=11 // pred_check_branch
          %197 = sbr.rel (%p195) target = $region24
        $region23: #{tpu_custom_call.1} parent=11 // pred_region
          _
        $region24: #{tpu_custom_call.1} parent=11 // pred_fallthru
          _
        // Predicated region
        $region25: #{tpu_custom_call.1} parent=11 // pred_check
          %p198 = pneg %p128
        $region26: #{tpu_custom_call.1} parent=11 // pred_check_branch
          %200 = sbr.rel (%p198) target = $region28
        $region27: #{tpu_custom_call.1} parent=11 // pred_region
          _
        $region28: #{tpu_custom_call.1} parent=11 // pred_fallthru
          _
      $region12: #{tpu_custom_call.1} parent=5 // pred_fallthru
        _
      %p201 = scmp.lt.s32.totalorder %s18, 2
      // Predicated region
      $region29: #{tpu_custom_call.1} parent=5 // pred_check
        %p202 = pneg %p201
      $region30: #{tpu_custom_call.1} parent=5 // pred_check_branch
        %204 = sbr.rel (%p202) target = $region32
      $region31: #{tpu_custom_call.1} parent=5 // pred_region
        // Predicated region
        $region33: #{tpu_custom_call.1} parent=31 // pred_check
          %p205 = pneg %p38
        $region34: #{tpu_custom_call.1} parent=31 // pred_check_branch
          %207 = sbr.rel (%p205) target = $region36
        $region35: #{tpu_custom_call.1} parent=31 // pred_region
          %s208 = sand.u32 %s28, 1
          %s209 = scalar_lea.sflag [#allocation3], %s208
          %s210 = sand.u32 %s28, 1
          %s211 = smul.addr %s210, 64
          %s212 = scalar_lea.vmem [#allocation2], %s211
          %s213 = smul.u32 16, %s18
          %s215 = ssub.s32 1024, 1024
          %216 = vsyncadd %s209, %s215
          %s217 = smul.addr %s213, 64
          %s218 = scalar_lea.hbm %s0, %s217
          %s219 = sshll.u32 %s212, 4
          %s220 = int_to_ptr.vmem [resolvable:$true] %s219
          %225 = dma.hbm_to_vmem [thread:$0]  %s218, 1024, %s220, %s209, 64, 64, 4
        $region36: #{tpu_custom_call.1} parent=31 // pred_fallthru
          _
      $region32: #{tpu_custom_call.1} parent=5 // pred_fallthru
        _
      %p226 = scmp.le.s32.totalorder 1, %s18
      %p227 = scmp.lt.s32.totalorder %s18, 3
      %p228 = pnand %p226, %p227
      %p229 = pneg %p228
      // Predicated region
      $region37: #{tpu_custom_call.1} parent=5 // pred_check
        _
      $region38: #{tpu_custom_call.1} parent=5 // pred_check_branch
        %231 = sbr.rel (%p228) target = $region40
      $region39: #{tpu_custom_call.1} parent=5 // pred_region
        %s232 = ssub.s32 %s18, 1
        %s233 = sand.u32 %s31, 1
        %s234 = scalar_lea.sflag [#allocation3], %s233
        %s235 = sand.u32 %s31, 1
        %s236 = smul.addr %s235, 64
        %s237 = scalar_lea.vmem [#allocation2], %s236
        // Predicated region
        $region41: #{tpu_custom_call.1} parent=39 // pred_check
          %p238 = pneg %p44
        $region42: #{tpu_custom_call.1} parent=39 // pred_check_branch
          %240 = sbr.rel (%p238) target = $region44
        $region43: #{tpu_custom_call.1} parent=39 // pred_region
          %241 = dma.done %s234, 1024
        $region44: #{tpu_custom_call.1} parent=39 // pred_fallthru
          _
        // Predicated region
        $region45: #{tpu_custom_call.1} parent=39 // pred_check
          %p242 = pneg %p65
        $region46: #{tpu_custom_call.1} parent=39 // pred_check_branch
          %244 = sbr.rel (%p242) target = $region48
        $region47: #{tpu_custom_call.1} parent=39 // pred_region
          %245 = dma.done [#allocation6], 2048
        $region48: #{tpu_custom_call.1} parent=39 // pred_fallthru
          _
        // Predicated region
        $region49: #{tpu_custom_call.1} parent=39 // pred_check
          %p246 = pneg %p86
        $region50: #{tpu_custom_call.1} parent=39 // pred_check_branch
          %248 = sbr.rel (%p246) target = $region52
        $region51: #{tpu_custom_call.1} parent=39 // pred_region
          %249 = dma.done [#allocation6], 2048
        $region52: #{tpu_custom_call.1} parent=39 // pred_fallthru
          _
        %s250 = sand.u32 %s31, 1
        %s251 = scalar_lea.sflag [#allocation3], %s250
        %s252 = sand.u32 %s31, 1
        %s253 = smul.addr %s252, 64
        %s254 = scalar_lea.vmem [#allocation2], %s253
        %p255 = pneg %p44
        %p256 = pneg %p41
        %p257 = pneg %p65
        %p258 = pneg %p62
        %p259 = pneg %p86
        %p260 = pneg %p83
        %p261 = pneg %p107
        %p262 = pneg %p104
        %p263 = pneg %p128
        %p264 = pneg %p125
        %p265 = pneg %p154
        %p266 = pneg %p151
        %s267 = sand.u32 %s141, 1
        %s268 = scalar_lea.sflag [#allocation4], %s267
        %s269 = sand.u32 %s141, 1
        %s270 = smul.addr %s269, 128
        %s271 = scalar_lea.vmem [#allocation8], %s270
        %s272 = smul.u32 16, %s23
        %s273 = smul.u32 16, %s23
        %v275 = vld [vmem:[%s237] sm:$0xf]
        %v276 = vld [vmem:[%s237 + $0x4] sm:$0xf]
        %v277 = vld [vmem:[%s237 + $0x8] sm:$0xf]
        %v278 = vld [vmem:[%s237 + $0xc] sm:$0xf]
        %v279 = vld [vmem:[%s237 + $0x10] sm:$0xf]
        %v280 = vld [vmem:[%s237 + $0x14] sm:$0xf]
        %v281 = vld [vmem:[%s237 + $0x18] sm:$0xf]
        %v282 = vld [vmem:[%s237 + $0x1c] sm:$0xf]
        %v283 = vld [vmem:[%s237 + $0x20] sm:$0xf]
        %v284 = vld [vmem:[%s237 + $0x24] sm:$0xf]
        %v285 = vld [vmem:[%s237 + $0x28] sm:$0xf]
        %v286 = vld [vmem:[%s237 + $0x2c] sm:$0xf]
        %v287 = vld [vmem:[%s237 + $0x30] sm:$0xf]
        %v288 = vld [vmem:[%s237 + $0x34] sm:$0xf]
        %v289 = vld [vmem:[%s237 + $0x38] sm:$0xf]
        %v290 = vld [vmem:[%s237 + $0x3c] sm:$0xf]
        %v291 = vld [vmem:[#allocation5] sm:$0xff]
        %v292 = vld [vmem:[#allocation5 + $0x8] sm:$0xff]
        %v293 = vld [vmem:[#allocation5 + $0x10] sm:$0xff]
        %v294 = vld [vmem:[#allocation5 + $0x18] sm:$0xff]
        %v295 = vld [vmem:[#allocation5 + $0x20] sm:$0xff]
        %v296 = vld [vmem:[#allocation5 + $0x28] sm:$0xff]
        %v297 = vld [vmem:[#allocation5 + $0x30] sm:$0xff]
        %v298 = vld [vmem:[#allocation5 + $0x38] sm:$0xff]
        %v299 = vld [vmem:[#allocation5 + $0x40] sm:$0xff]
        %v300 = vld [vmem:[#allocation5 + $0x48] sm:$0xff]
        %v301 = vld [vmem:[#allocation5 + $0x50] sm:$0xff]
        %v302 = vld [vmem:[#allocation5 + $0x58] sm:$0xff]
        %v303 = vld [vmem:[#allocation5 + $0x60] sm:$0xff]
        %v304 = vld [vmem:[#allocation5 + $0x68] sm:$0xff]
        %v305 = vld [vmem:[#allocation5 + $0x70] sm:$0xff]
        %v306 = vld [vmem:[#allocation5 + $0x78] sm:$0xff]
        %v323 = vunpack.c.l.b16 %v275
        %v324 = vunpack.c.l.b16 %v276
        %v325 = vunpack.c.l.b16 %v277
        %v326 = vunpack.c.l.b16 %v278
        %v327 = vunpack.c.l.b16 %v279
        %v328 = vunpack.c.l.b16 %v280
        %v329 = vunpack.c.l.b16 %v281
        %v330 = vunpack.c.l.b16 %v282
        %v331 = vunpack.c.l.b16 %v283
        %v332 = vunpack.c.l.b16 %v284
        %v333 = vunpack.c.l.b16 %v285
        %v334 = vunpack.c.l.b16 %v286
        %v335 = vunpack.c.l.b16 %v287
        %v336 = vunpack.c.l.b16 %v288
        %v337 = vunpack.c.l.b16 %v289
        %v338 = vunpack.c.l.b16 %v290
        %v339 = vpack.c.b16 %v324, %v323
        %v340 = vpack.c.b16 %v326, %v325
        %v341 = vpack.c.b16 %v328, %v327
        %v342 = vpack.c.b16 %v330, %v329
        %v343 = vpack.c.b16 %v332, %v331
        %v344 = vpack.c.b16 %v334, %v333
        %v345 = vpack.c.b16 %v336, %v335
        %v346 = vpack.c.b16 %v338, %v337
        %v371 = vunpack.c.l.b16 %v291
        %v372 = vunpack.c.h.b16 %v291
        %v373 = vunpack.c.l.b16 %v292
        %v374 = vunpack.c.h.b16 %v292
        %v375 = vunpack.c.l.b16 %v293
        %v376 = vunpack.c.h.b16 %v293
        %v377 = vunpack.c.l.b16 %v294
        %v378 = vunpack.c.h.b16 %v294
        %v379 = vunpack.c.l.b16 %v295
        %v380 = vunpack.c.h.b16 %v295
        %v381 = vunpack.c.l.b16 %v296
        %v382 = vunpack.c.h.b16 %v296
        %v383 = vunpack.c.l.b16 %v297
        %v384 = vunpack.c.h.b16 %v297
        %v385 = vunpack.c.l.b16 %v298
        %v386 = vunpack.c.h.b16 %v298
        %v387 = vunpack.c.l.b16 %v299
        %v388 = vunpack.c.h.b16 %v299
        %v389 = vunpack.c.l.b16 %v300
        %v390 = vunpack.c.h.b16 %v300
        %v391 = vunpack.c.l.b16 %v301
        %v392 = vunpack.c.h.b16 %v301
        %v393 = vunpack.c.l.b16 %v302
        %v394 = vunpack.c.h.b16 %v302
        %v395 = vunpack.c.l.b16 %v303
        %v396 = vunpack.c.h.b16 %v303
        %v397 = vunpack.c.l.b16 %v304
        %v398 = vunpack.c.h.b16 %v304
        %v399 = vunpack.c.l.b16 %v305
        %v400 = vunpack.c.h.b16 %v305
        %v401 = vunpack.c.l.b16 %v306
        %v402 = vunpack.c.h.b16 %v306
        %v403 = vpack.c.b16 %v373, %v371
        %v404 = vpack.c.b16 %v374, %v372
        %v405 = vpack.c.b16 %v377, %v375
        %v406 = vpack.c.b16 %v378, %v376
        %v407 = vpack.c.b16 %v381, %v379
        %v408 = vpack.c.b16 %v382, %v380
        %v409 = vpack.c.b16 %v385, %v383
        %v410 = vpack.c.b16 %v386, %v384
        %v411 = vpack.c.b16 %v389, %v387
        %v412 = vpack.c.b16 %v390, %v388
        %v413 = vpack.c.b16 %v393, %v391
        %v414 = vpack.c.b16 %v394, %v392
        %v415 = vpack.c.b16 %v397, %v395
        %v416 = vpack.c.b16 %v398, %v396
        %v417 = vpack.c.b16 %v401, %v399
        %v418 = vpack.c.b16 %v402, %v400
        %435 = vmatprep.subr.bf16.mxu0 %v418
        %436 = vmatpush1.bf16.msra.mxu0 %v417
        %437 = vmatprep.subr.bf16.mxu0 %v416
        %438 = vmatpush1.bf16.msra.mxu0 %v415
        %439 = vmatprep.subr.bf16.mxu0 %v414
        %440 = vmatpush1.bf16.msra.mxu0 %v413
        %441 = vmatprep.subr.bf16.mxu0 %v412
        %442 = vmatpush1.bf16.msra.mxu0 %v411
        %443 = vmatprep.subr.bf16.mxu0 %v410
        %444 = vmatpush1.bf16.msra.mxu0 %v409
        %445 = vmatprep.subr.bf16.mxu0 %v408
        %446 = vmatpush1.bf16.msra.mxu0 %v407
        %447 = vmatprep.subr.bf16.mxu0 %v406
        %448 = vmatpush1.bf16.msra.mxu0 %v405
        %449 = vmatprep.subr.bf16.mxu0 %v404
        %450 = vmatpush1.bf16.msra.mxu0 %v403
        %451 = vmatprep.subr.bf16.mxu0 0
        %452 = vmatpush2.bf16.msra.mxu0 0
        %453 = vmatprep.subr.bf16.mxu0 0
        %454 = vmatpush2.bf16.msra.mxu0 0
        %455 = vmatprep.subr.bf16.mxu0 0
        %456 = vmatpush2.bf16.msra.mxu0 0
        %457 = vmatprep.subr.bf16.mxu0 0
        %458 = vmatpush2.bf16.msra.mxu0 0
        %459 = vmatprep.subr.bf16.mxu0 0
        %460 = vmatpush2.bf16.msra.mxu0 0
        %461 = vmatprep.subr.bf16.mxu0 0
        %462 = vmatpush2.bf16.msra.mxu0 0
        %463 = vmatprep.subr.bf16.mxu0 0
        %464 = vmatpush2.bf16.msra.mxu0 0
        %465 = vmatprep.subr.bf16.mxu0 0
        %466 = vmatpush2.bf16.msra.mxu0 0
        %467 = vmatprep.mubr.bf16.mxu0 0
        %468 = vmatmul.mubr.bf16.gmra.mxu0 %v339
        %v469 = vpop.f32.mrf.mxu0
        %v470 = vadd.f32 0.0, %v469
        %v471 = vpop.f32.mrf.mxu0
        %v472 = vadd.f32 0.0, %v471
        %v473 = vpop.f32.mrf.mxu0
        %v474 = vadd.f32 0.0, %v473
        %v475 = vpop.f32.mrf.mxu0
        %v476 = vadd.f32 0.0, %v475
        %477 = vmatprep.mubr.bf16.mxu0 0
        %478 = vmatmul.mubr.bf16.gmra.mxu0 %v340
        %v479 = vpop.f32.mrf.mxu0
        %v480 = vadd.f32 0.0, %v479
        %v481 = vpop.f32.mrf.mxu0
        %v482 = vadd.f32 0.0, %v481
        %v483 = vpop.f32.mrf.mxu0
        %v484 = vadd.f32 0.0, %v483
        %v485 = vpop.f32.mrf.mxu0
        %v486 = vadd.f32 0.0, %v485
        %487 = vmatprep.mubr.bf16.mxu0 0
        %488 = vmatmul.mubr.bf16.gmra.mxu0 %v341
        %v489 = vpop.f32.mrf.mxu0
        %v490 = vadd.f32 0.0, %v489
        %v491 = vpop.f32.mrf.mxu0
        %v492 = vadd.f32 0.0, %v491
        %v493 = vpop.f32.mrf.mxu0
        %v494 = vadd.f32 0.0, %v493
        %v495 = vpop.f32.mrf.mxu0
        %v496 = vadd.f32 0.0, %v495
        %497 = vmatprep.mubr.bf16.mxu0 0
        %498 = vmatmul.mubr.bf16.gmra.mxu0 %v342
        %v499 = vpop.f32.mrf.mxu0
        %v500 = vadd.f32 0.0, %v499
        %v501 = vpop.f32.mrf.mxu0
        %v502 = vadd.f32 0.0, %v501
        %v503 = vpop.f32.mrf.mxu0
        %v504 = vadd.f32 0.0, %v503
        %v505 = vpop.f32.mrf.mxu0
        %v506 = vadd.f32 0.0, %v505
        %507 = vmatprep.mubr.bf16.mxu0 0
        %508 = vmatmul.mubr.bf16.gmra.mxu0 %v343
        %v509 = vpop.f32.mrf.mxu0
        %v510 = vadd.f32 0.0, %v509
        %v511 = vpop.f32.mrf.mxu0
        %v512 = vadd.f32 0.0, %v511
        %v513 = vpop.f32.mrf.mxu0
        %v514 = vadd.f32 0.0, %v513
        %v515 = vpop.f32.mrf.mxu0
        %v516 = vadd.f32 0.0, %v515
        %517 = vmatprep.mubr.bf16.mxu0 0
        %518 = vmatmul.mubr.bf16.gmra.mxu0 %v344
        %v519 = vpop.f32.mrf.mxu0
        %v520 = vadd.f32 0.0, %v519
        %v521 = vpop.f32.mrf.mxu0
        %v522 = vadd.f32 0.0, %v521
        %v523 = vpop.f32.mrf.mxu0
        %v524 = vadd.f32 0.0, %v523
        %v525 = vpop.f32.mrf.mxu0
        %v526 = vadd.f32 0.0, %v525
        %527 = vmatprep.mubr.bf16.mxu0 0
        %528 = vmatmul.mubr.bf16.gmra.mxu0 %v345
        %v529 = vpop.f32.mrf.mxu0
        %v530 = vadd.f32 0.0, %v529
        %v531 = vpop.f32.mrf.mxu0
        %v532 = vadd.f32 0.0, %v531
        %v533 = vpop.f32.mrf.mxu0
        %v534 = vadd.f32 0.0, %v533
        %v535 = vpop.f32.mrf.mxu0
        %v536 = vadd.f32 0.0, %v535
        %537 = vmatprep.mubr.bf16.mxu0 0
        %538 = vmatmul.mubr.bf16.gmra.mxu0 %v346
        %v539 = vpop.f32.mrf.mxu0
        %v540 = vadd.f32 0.0, %v539
        %v541 = vpop.f32.mrf.mxu0
        %v542 = vadd.f32 0.0, %v541
        %v543 = vpop.f32.mrf.mxu0
        %v544 = vadd.f32 0.0, %v543
        %v545 = vpop.f32.mrf.mxu0
        %v546 = vadd.f32 0.0, %v545
        %547 = vdwg.mxu0
        %v548 = vmax.f32 %v470, 0.0
        %v549 = vmax.f32 %v472, 0.0
        %v550 = vmax.f32 %v474, 0.0
        %v551 = vmax.f32 %v476, 0.0
        %v552 = vmax.f32 %v480, 0.0
        %v553 = vmax.f32 %v482, 0.0
        %v554 = vmax.f32 %v484, 0.0
        %v555 = vmax.f32 %v486, 0.0
        %v556 = vmax.f32 %v490, 0.0
        %v557 = vmax.f32 %v492, 0.0
        %v558 = vmax.f32 %v494, 0.0
        %v559 = vmax.f32 %v496, 0.0
        %v560 = vmax.f32 %v500, 0.0
        %v561 = vmax.f32 %v502, 0.0
        %v562 = vmax.f32 %v504, 0.0
        %v563 = vmax.f32 %v506, 0.0
        %v564 = vmax.f32 %v510, 0.0
        %v565 = vmax.f32 %v512, 0.0
        %v566 = vmax.f32 %v514, 0.0
        %v567 = vmax.f32 %v516, 0.0
        %v568 = vmax.f32 %v520, 0.0
        %v569 = vmax.f32 %v522, 0.0
        %v570 = vmax.f32 %v524, 0.0
        %v571 = vmax.f32 %v526, 0.0
        %v572 = vmax.f32 %v530, 0.0
        %v573 = vmax.f32 %v532, 0.0
        %v574 = vmax.f32 %v534, 0.0
        %v575 = vmax.f32 %v536, 0.0
        %v576 = vmax.f32 %v540, 0.0
        %v577 = vmax.f32 %v542, 0.0
        %v578 = vmax.f32 %v544, 0.0
        %v579 = vmax.f32 %v546, 0.0
        %v580 = vpack.c.bf16 %v550, %v548
        %v581 = vpack.c.bf16 %v551, %v549
        %v582 = vpack.c.bf16 %v554, %v552
        %v583 = vpack.c.bf16 %v555, %v553
        %v584 = vpack.c.bf16 %v558, %v556
        %v585 = vpack.c.bf16 %v559, %v557
        %v586 = vpack.c.bf16 %v562, %v560
        %v587 = vpack.c.bf16 %v563, %v561
        %v588 = vpack.c.bf16 %v566, %v564
        %v589 = vpack.c.bf16 %v567, %v565
        %v590 = vpack.c.bf16 %v570, %v568
        %v591 = vpack.c.bf16 %v571, %v569
        %v592 = vpack.c.bf16 %v574, %v572
        %v593 = vpack.c.bf16 %v575, %v573
        %v594 = vpack.c.bf16 %v578, %v576
        %v595 = vpack.c.bf16 %v579, %v577
        %v596 = vld [vmem:[#allocation7] sm:$0xf]
        %v597 = vld [vmem:[#allocation7 + $0x4] sm:$0xf]
        %v598 = vld [vmem:[#allocation7 + $0x8] sm:$0xf]
        %v599 = vld [vmem:[#allocation7 + $0xc] sm:$0xf]
        %v600 = vld [vmem:[#allocation7 + $0x10] sm:$0xf]
        %v601 = vld [vmem:[#allocation7 + $0x14] sm:$0xf]
        %v602 = vld [vmem:[#allocation7 + $0x18] sm:$0xf]
        %v603 = vld [vmem:[#allocation7 + $0x1c] sm:$0xf]
        %v604 = vld [vmem:[#allocation7 + $0x20] sm:$0xf]
        %v605 = vld [vmem:[#allocation7 + $0x24] sm:$0xf]
        %v606 = vld [vmem:[#allocation7 + $0x28] sm:$0xf]
        %v607 = vld [vmem:[#allocation7 + $0x2c] sm:$0xf]
        %v608 = vld [vmem:[#allocation7 + $0x30] sm:$0xf]
        %v609 = vld [vmem:[#allocation7 + $0x34] sm:$0xf]
        %v610 = vld [vmem:[#allocation7 + $0x38] sm:$0xf]
        %v611 = vld [vmem:[#allocation7 + $0x3c] sm:$0xf]
        %v612 = vld [vmem:[#allocation7 + $0x40] sm:$0xf]
        %v613 = vld [vmem:[#allocation7 + $0x44] sm:$0xf]
        %v614 = vld [vmem:[#allocation7 + $0x48] sm:$0xf]
        %v615 = vld [vmem:[#allocation7 + $0x4c] sm:$0xf]
        %v616 = vld [vmem:[#allocation7 + $0x50] sm:$0xf]
        %v617 = vld [vmem:[#allocation7 + $0x54] sm:$0xf]
        %v618 = vld [vmem:[#allocation7 + $0x58] sm:$0xf]
        %v619 = vld [vmem:[#allocation7 + $0x5c] sm:$0xf]
        %v620 = vld [vmem:[#allocation7 + $0x60] sm:$0xf]
        %v621 = vld [vmem:[#allocation7 + $0x64] sm:$0xf]
        %v622 = vld [vmem:[#allocation7 + $0x68] sm:$0xf]
        %v623 = vld [vmem:[#allocation7 + $0x6c] sm:$0xf]
        %v624 = vld [vmem:[#allocation7 + $0x70] sm:$0xf]
        %v625 = vld [vmem:[#allocation7 + $0x74] sm:$0xf]
        %v626 = vld [vmem:[#allocation7 + $0x78] sm:$0xf]
        %v627 = vld [vmem:[#allocation7 + $0x7c] sm:$0xf]
        %v660 = vunpack.c.l.b16 %v596
        %v661 = vunpack.c.l.b16 %v597
        %v662 = vunpack.c.l.b16 %v598
        %v663 = vunpack.c.l.b16 %v599
        %v664 = vunpack.c.l.b16 %v600
        %v665 = vunpack.c.l.b16 %v601
        %v666 = vunpack.c.l.b16 %v602
        %v667 = vunpack.c.l.b16 %v603
        %v668 = vunpack.c.l.b16 %v604
        %v669 = vunpack.c.l.b16 %v605
        %v670 = vunpack.c.l.b16 %v606
        %v671 = vunpack.c.l.b16 %v607
        %v672 = vunpack.c.l.b16 %v608
        %v673 = vunpack.c.l.b16 %v609
        %v674 = vunpack.c.l.b16 %v610
        %v675 = vunpack.c.l.b16 %v611
        %v676 = vunpack.c.l.b16 %v612
        %v677 = vunpack.c.l.b16 %v613
        %v678 = vunpack.c.l.b16 %v614
        %v679 = vunpack.c.l.b16 %v615
        %v680 = vunpack.c.l.b16 %v616
        %v681 = vunpack.c.l.b16 %v617
        %v682 = vunpack.c.l.b16 %v618
        %v683 = vunpack.c.l.b16 %v619
        %v684 = vunpack.c.l.b16 %v620
        %v685 = vunpack.c.l.b16 %v621
        %v686 = vunpack.c.l.b16 %v622
        %v687 = vunpack.c.l.b16 %v623
        %v688 = vunpack.c.l.b16 %v624
        %v689 = vunpack.c.l.b16 %v625
        %v690 = vunpack.c.l.b16 %v626
        %v691 = vunpack.c.l.b16 %v627
        %v692 = vpack.c.b16 %v661, %v660
        %v693 = vpack.c.b16 %v663, %v662
        %v694 = vpack.c.b16 %v665, %v664
        %v695 = vpack.c.b16 %v667, %v666
        %v696 = vpack.c.b16 %v669, %v668
        %v697 = vpack.c.b16 %v671, %v670
        %v698 = vpack.c.b16 %v673, %v672
        %v699 = vpack.c.b16 %v675, %v674
        %v700 = vpack.c.b16 %v677, %v676
        %v701 = vpack.c.b16 %v679, %v678
        %v702 = vpack.c.b16 %v681, %v680
        %v703 = vpack.c.b16 %v683, %v682
        %v704 = vpack.c.b16 %v685, %v684
        %v705 = vpack.c.b16 %v687, %v686
        %v706 = vpack.c.b16 %v689, %v688
        %v707 = vpack.c.b16 %v691, %v690
        %724 = vmatprep.subr.bf16.mxu0 0
        %725 = vmatpush1.bf16.msra.mxu0 %v699
        %726 = vmatprep.subr.bf16.mxu0 0
        %727 = vmatpush1.bf16.msra.mxu0 %v698
        %728 = vmatprep.subr.bf16.mxu0 0
        %729 = vmatpush1.bf16.msra.mxu0 %v697
        %730 = vmatprep.subr.bf16.mxu0 0
        %731 = vmatpush1.bf16.msra.mxu0 %v696
        %732 = vmatprep.subr.bf16.mxu0 0
        %733 = vmatpush1.bf16.msra.mxu0 %v695
        %734 = vmatprep.subr.bf16.mxu0 0
        %735 = vmatpush1.bf16.msra.mxu0 %v694
        %736 = vmatprep.subr.bf16.mxu0 0
        %737 = vmatpush1.bf16.msra.mxu0 %v693
        %738 = vmatprep.subr.bf16.mxu0 0
        %739 = vmatpush1.bf16.msra.mxu0 %v692
        %740 = vmatprep.subr.bf16.mxu0 0
        %741 = vmatpush2.bf16.msra.mxu0 %v707
        %742 = vmatprep.subr.bf16.mxu0 0
        %743 = vmatpush2.bf16.msra.mxu0 %v706
        %744 = vmatprep.subr.bf16.mxu0 0
        %745 = vmatpush2.bf16.msra.mxu0 %v705
        %746 = vmatprep.subr.bf16.mxu0 0
        %747 = vmatpush2.bf16.msra.mxu0 %v704
        %748 = vmatprep.subr.bf16.mxu0 0
        %749 = vmatpush2.bf16.msra.mxu0 %v703
        %750 = vmatprep.subr.bf16.mxu0 0
        %751 = vmatpush2.bf16.msra.mxu0 %v702
        %752 = vmatprep.subr.bf16.mxu0 0
        %753 = vmatpush2.bf16.msra.mxu0 %v701
        %754 = vmatprep.subr.bf16.mxu0 0
        %755 = vmatpush2.bf16.msra.mxu0 %v700
        %756 = vmatprep.mubr.bf16.mxu0 %v581
        %757 = vmatmul.mubr.bf16.gmra.mxu0 %v580
        %v758 = vpop.f32.mrf.mxu0
        %v759 = vadd.f32 0.0, %v758
        %v760 = vpop.f32.mrf.mxu0
        %v761 = vpop.f32.mrf.mxu0
        %v762 = vadd.f32 0.0, %v761
        %v763 = vpop.f32.mrf.mxu0
        %764 = vmatprep.mubr.bf16.mxu0 %v583
        %765 = vmatmul.mubr.bf16.gmra.mxu0 %v582
        %v766 = vpop.f32.mrf.mxu0
        %v767 = vadd.f32 0.0, %v766
        %v768 = vpop.f32.mrf.mxu0
        %v769 = vpop.f32.mrf.mxu0
        %v770 = vadd.f32 0.0, %v769
        %v771 = vpop.f32.mrf.mxu0
        %772 = vmatprep.mubr.bf16.mxu0 %v585
        %773 = vmatmul.mubr.bf16.gmra.mxu0 %v584
        %v774 = vpop.f32.mrf.mxu0
        %v775 = vadd.f32 0.0, %v774
        %v776 = vpop.f32.mrf.mxu0
        %v777 = vpop.f32.mrf.mxu0
        %v778 = vadd.f32 0.0, %v777
        %v779 = vpop.f32.mrf.mxu0
        %780 = vmatprep.mubr.bf16.mxu0 %v587
        %781 = vmatmul.mubr.bf16.gmra.mxu0 %v586
        %v782 = vpop.f32.mrf.mxu0
        %v783 = vadd.f32 0.0, %v782
        %v784 = vpop.f32.mrf.mxu0
        %v785 = vpop.f32.mrf.mxu0
        %v786 = vadd.f32 0.0, %v785
        %v787 = vpop.f32.mrf.mxu0
        %788 = vmatprep.mubr.bf16.mxu0 %v589
        %789 = vmatmul.mubr.bf16.gmra.mxu0 %v588
        %v790 = vpop.f32.mrf.mxu0
        %v791 = vadd.f32 0.0, %v790
        %v792 = vpop.f32.mrf.mxu0
        %v793 = vpop.f32.mrf.mxu0
        %v794 = vadd.f32 0.0, %v793
        %v795 = vpop.f32.mrf.mxu0
        %796 = vmatprep.mubr.bf16.mxu0 %v591
        %797 = vmatmul.mubr.bf16.gmra.mxu0 %v590
        %v798 = vpop.f32.mrf.mxu0
        %v799 = vadd.f32 0.0, %v798
        %v800 = vpop.f32.mrf.mxu0
        %v801 = vpop.f32.mrf.mxu0
        %v802 = vadd.f32 0.0, %v801
        %v803 = vpop.f32.mrf.mxu0
        %804 = vmatprep.mubr.bf16.mxu0 %v593
        %805 = vmatmul.mubr.bf16.gmra.mxu0 %v592
        %v806 = vpop.f32.mrf.mxu0
        %v807 = vadd.f32 0.0, %v806
        %v808 = vpop.f32.mrf.mxu0
        %v809 = vpop.f32.mrf.mxu0
        %v810 = vadd.f32 0.0, %v809
        %v811 = vpop.f32.mrf.mxu0
        %812 = vmatprep.mubr.bf16.mxu0 %v595
        %813 = vmatmul.mubr.bf16.gmra.mxu0 %v594
        %v814 = vpop.f32.mrf.mxu0
        %v815 = vadd.f32 0.0, %v814
        %v816 = vpop.f32.mrf.mxu0
        %v817 = vpop.f32.mrf.mxu0
        %v818 = vadd.f32 0.0, %v817
        %v819 = vpop.f32.mrf.mxu0
        %820 = vdwg.mxu0
        %v821 = vmax.f32 %v759, 0.0
        %v822 = vmax.f32 %v762, 0.0
        %v823 = vmax.f32 %v767, 0.0
        %v824 = vmax.f32 %v770, 0.0
        %v825 = vmax.f32 %v775, 0.0
        %v826 = vmax.f32 %v778, 0.0
        %v827 = vmax.f32 %v783, 0.0
        %v828 = vmax.f32 %v786, 0.0
        %v829 = vmax.f32 %v791, 0.0
        %v830 = vmax.f32 %v794, 0.0
        %v831 = vmax.f32 %v799, 0.0
        %v832 = vmax.f32 %v802, 0.0
        %v833 = vmax.f32 %v807, 0.0
        %v834 = vmax.f32 %v810, 0.0
        %v835 = vmax.f32 %v815, 0.0
        %v836 = vmax.f32 %v818, 0.0
        %837 = vadd.xlane.f32.xlu0 %v821
        %v838 = vpop.xlane.xlu0 %837
        %839 = vadd.xlane.f32.xlu0 %v822
        %v840 = vpop.xlane.xlu0 %839
        %841 = vadd.xlane.f32.xlu0 %v823
        %v842 = vpop.xlane.xlu0 %841
        %843 = vadd.xlane.f32.xlu0 %v824
        %v844 = vpop.xlane.xlu0 %843
        %845 = vadd.xlane.f32.xlu0 %v825
        %v846 = vpop.xlane.xlu0 %845
        %847 = vadd.xlane.f32.xlu0 %v826
        %v848 = vpop.xlane.xlu0 %847
        %849 = vadd.xlane.f32.xlu0 %v827
        %v850 = vpop.xlane.xlu0 %849
        %851 = vadd.xlane.f32.xlu0 %v828
        %v852 = vpop.xlane.xlu0 %851
        %853 = vadd.xlane.f32.xlu0 %v829
        %v854 = vpop.xlane.xlu0 %853
        %855 = vadd.xlane.f32.xlu0 %v830
        %v856 = vpop.xlane.xlu0 %855
        %857 = vadd.xlane.f32.xlu0 %v831
        %v858 = vpop.xlane.xlu0 %857
        %859 = vadd.xlane.f32.xlu0 %v832
        %v860 = vpop.xlane.xlu0 %859
        %861 = vadd.xlane.f32.xlu0 %v833
        %v862 = vpop.xlane.xlu0 %861
        %863 = vadd.xlane.f32.xlu0 %v834
        %v864 = vpop.xlane.xlu0 %863
        %865 = vadd.xlane.f32.xlu0 %v835
        %v866 = vpop.xlane.xlu0 %865
        %867 = vadd.xlane.f32.xlu0 %v836
        %v868 = vpop.xlane.xlu0 %867
        %v869 = vrcp.pop 128.0
        %v870 = vmul.f32 %v838, %v869
        %v871 = vmul.f32 %v840, %v869
        %v872 = vmul.f32 %v842, %v869
        %v873 = vmul.f32 %v844, %v869
        %v874 = vmul.f32 %v846, %v869
        %v875 = vmul.f32 %v848, %v869
        %v876 = vmul.f32 %v850, %v869
        %v877 = vmul.f32 %v852, %v869
        %v878 = vmul.f32 %v854, %v869
        %v879 = vmul.f32 %v856, %v869
        %v880 = vmul.f32 %v858, %v869
        %v881 = vmul.f32 %v860, %v869
        %v882 = vmul.f32 %v862, %v869
        %v883 = vmul.f32 %v864, %v869
        %v884 = vmul.f32 %v866, %v869
        %v885 = vmul.f32 %v868, %v869
        %v886 = vsub.f32 %v821, %v870
        %v887 = vsub.f32 %v822, %v871
        %v888 = vsub.f32 %v823, %v872
        %v889 = vsub.f32 %v824, %v873
        %v890 = vsub.f32 %v825, %v874
        %v891 = vsub.f32 %v826, %v875
        %v892 = vsub.f32 %v827, %v876
        %v893 = vsub.f32 %v828, %v877
        %v894 = vsub.f32 %v829, %v878
        %v895 = vsub.f32 %v830, %v879
        %v896 = vsub.f32 %v831, %v880
        %v897 = vsub.f32 %v832, %v881
        %v898 = vsub.f32 %v833, %v882
        %v899 = vsub.f32 %v834, %v883
        %v900 = vsub.f32 %v835, %v884
        %v901 = vsub.f32 %v836, %v885
        %v902 = vmul.f32 %v886, %v886
        %v903 = vmul.f32 %v887, %v887
        %v904 = vmul.f32 %v888, %v888
        %v905 = vmul.f32 %v889, %v889
        %v906 = vmul.f32 %v890, %v890
        %v907 = vmul.f32 %v891, %v891
        %v908 = vmul.f32 %v892, %v892
        %v909 = vmul.f32 %v893, %v893
        %v910 = vmul.f32 %v894, %v894
        %v911 = vmul.f32 %v895, %v895
        %v912 = vmul.f32 %v896, %v896
        %v913 = vmul.f32 %v897, %v897
        %v914 = vmul.f32 %v898, %v898
        %v915 = vmul.f32 %v899, %v899
        %v916 = vmul.f32 %v900, %v900
        %v917 = vmul.f32 %v901, %v901
        %918 = vadd.xlane.f32.xlu0 %v902
        %v919 = vpop.xlane.xlu0 %918
        %920 = vadd.xlane.f32.xlu0 %v903
        %v921 = vpop.xlane.xlu0 %920
        %922 = vadd.xlane.f32.xlu0 %v904
        %v923 = vpop.xlane.xlu0 %922
        %924 = vadd.xlane.f32.xlu0 %v905
        %v925 = vpop.xlane.xlu0 %924
        %926 = vadd.xlane.f32.xlu0 %v906
        %v927 = vpop.xlane.xlu0 %926
        %928 = vadd.xlane.f32.xlu0 %v907
        %v929 = vpop.xlane.xlu0 %928
        %930 = vadd.xlane.f32.xlu0 %v908
        %v931 = vpop.xlane.xlu0 %930
        %932 = vadd.xlane.f32.xlu0 %v909
        %v933 = vpop.xlane.xlu0 %932
        %934 = vadd.xlane.f32.xlu0 %v910
        %v935 = vpop.xlane.xlu0 %934
        %936 = vadd.xlane.f32.xlu0 %v911
        %v937 = vpop.xlane.xlu0 %936
        %938 = vadd.xlane.f32.xlu0 %v912
        %v939 = vpop.xlane.xlu0 %938
        %940 = vadd.xlane.f32.xlu0 %v913
        %v941 = vpop.xlane.xlu0 %940
        %942 = vadd.xlane.f32.xlu0 %v914
        %v943 = vpop.xlane.xlu0 %942
        %944 = vadd.xlane.f32.xlu0 %v915
        %v945 = vpop.xlane.xlu0 %944
        %946 = vadd.xlane.f32.xlu0 %v916
        %v947 = vpop.xlane.xlu0 %946
        %948 = vadd.xlane.f32.xlu0 %v917
        %v949 = vpop.xlane.xlu0 %948
        %v950 = vmul.f32 %v919, %v869
        %v951 = vmul.f32 %v921, %v869
        %v952 = vmul.f32 %v923, %v869
        %v953 = vmul.f32 %v925, %v869
        %v954 = vmul.f32 %v927, %v869
        %v955 = vmul.f32 %v929, %v869
        %v956 = vmul.f32 %v931, %v869
        %v957 = vmul.f32 %v933, %v869
        %v958 = vmul.f32 %v935, %v869
        %v959 = vmul.f32 %v937, %v869
        %v960 = vmul.f32 %v939, %v869
        %v961 = vmul.f32 %v941, %v869
        %v962 = vmul.f32 %v943, %v869
        %v963 = vmul.f32 %v945, %v869
        %v964 = vmul.f32 %v947, %v869
        %v965 = vmul.f32 %v949, %v869
        %v966 = vadd.f32 %v950, 1e-05
        %v967 = vadd.f32 %v951, 1e-05
        %v968 = vadd.f32 %v952, 1e-05
        %v969 = vadd.f32 %v953, 1e-05
        %v970 = vadd.f32 %v954, 1e-05
        %v971 = vadd.f32 %v955, 1e-05
        %v972 = vadd.f32 %v956, 1e-05
        %v973 = vadd.f32 %v957, 1e-05
        %v974 = vadd.f32 %v958, 1e-05
        %v975 = vadd.f32 %v959, 1e-05
        %v976 = vadd.f32 %v960, 1e-05
        %v977 = vadd.f32 %v961, 1e-05
        %v978 = vadd.f32 %v962, 1e-05
        %v979 = vadd.f32 %v963, 1e-05
        %v980 = vadd.f32 %v964, 1e-05
        %v981 = vadd.f32 %v965, 1e-05
        %v982 = vrsqrt.pop %v966
        %v983 = vrsqrt.pop %v967
        %v984 = vrsqrt.pop %v968
        %v985 = vrsqrt.pop %v969
        %v986 = vrsqrt.pop %v970
        %v987 = vrsqrt.pop %v971
        %v988 = vrsqrt.pop %v972
        %v989 = vrsqrt.pop %v973
        %v990 = vrsqrt.pop %v974
        %v991 = vrsqrt.pop %v975
        %v992 = vrsqrt.pop %v976
        %v993 = vrsqrt.pop %v977
        %v994 = vrsqrt.pop %v978
        %v995 = vrsqrt.pop %v979
        %v996 = vrsqrt.pop %v980
        %v997 = vrsqrt.pop %v981
        %v998 = vmul.f32 %v886, %v982
        %v999 = vmul.f32 %v887, %v983
        %v1000 = vmul.f32 %v888, %v984
        %v1001 = vmul.f32 %v889, %v985
        %v1002 = vmul.f32 %v890, %v986
        %v1003 = vmul.f32 %v891, %v987
        %v1004 = vmul.f32 %v892, %v988
        %v1005 = vmul.f32 %v893, %v989
        %v1006 = vmul.f32 %v894, %v990
        %v1007 = vmul.f32 %v895, %v991
        %v1008 = vmul.f32 %v896, %v992
        %v1009 = vmul.f32 %v897, %v993
        %v1010 = vmul.f32 %v898, %v994
        %v1011 = vmul.f32 %v899, %v995
        %v1012 = vmul.f32 %v900, %v996
        %v1013 = vmul.f32 %v901, %v997
        %v1014 = vld [vmem:[%s3] sm:$0x1]
        %v1016 = vlaneseq
        %v1017 = vshrl.u32 %v1016, 7
        %v1018 = vsub.s32 0, %v1017
        %v1019 = vrot.slane %v1014, %v1018
        %v1021 = vmul.f32 %v998, %v1019
        %v1022 = vmul.f32 %v999, %v1019
        %v1023 = vmul.f32 %v1000, %v1019
        %v1024 = vmul.f32 %v1001, %v1019
        %v1025 = vmul.f32 %v1002, %v1019
        %v1026 = vmul.f32 %v1003, %v1019
        %v1027 = vmul.f32 %v1004, %v1019
        %v1028 = vmul.f32 %v1005, %v1019
        %v1029 = vmul.f32 %v1006, %v1019
        %v1030 = vmul.f32 %v1007, %v1019
        %v1031 = vmul.f32 %v1008, %v1019
        %v1032 = vmul.f32 %v1009, %v1019
        %v1033 = vmul.f32 %v1010, %v1019
        %v1034 = vmul.f32 %v1011, %v1019
        %v1035 = vmul.f32 %v1012, %v1019
        %v1036 = vmul.f32 %v1013, %v1019
        %v1037 = vld [vmem:[%s4] sm:$0x1]
        %v1039 = vlaneseq
        %v1040 = vshrl.u32 %v1039, 7
        %v1041 = vsub.s32 0, %v1040
        %v1042 = vrot.slane %v1037, %v1041
        %v1044 = vadd.f32 %v1021, %v1042
        %v1045 = vadd.f32 %v1022, %v1042
        %v1046 = vadd.f32 %v1023, %v1042
        %v1047 = vadd.f32 %v1024, %v1042
        %v1048 = vadd.f32 %v1025, %v1042
        %v1049 = vadd.f32 %v1026, %v1042
        %v1050 = vadd.f32 %v1027, %v1042
        %v1051 = vadd.f32 %v1028, %v1042
        %v1052 = vadd.f32 %v1029, %v1042
        %v1053 = vadd.f32 %v1030, %v1042
        %v1054 = vadd.f32 %v1031, %v1042
        %v1055 = vadd.f32 %v1032, %v1042
        %v1056 = vadd.f32 %v1033, %v1042
        %v1057 = vadd.f32 %v1034, %v1042
        %v1058 = vadd.f32 %v1035, %v1042
        %v1059 = vadd.f32 %v1036, %v1042
        %1060 = vst [vmem:[%s271] sm:$0xff] %v1044
        %1061 = vst [vmem:[%s271 + $0x8] sm:$0xff] %v1045
        %1062 = vst [vmem:[%s271 + $0x10] sm:$0xff] %v1046
        %1063 = vst [vmem:[%s271 + $0x18] sm:$0xff] %v1047
        %1064 = vst [vmem:[%s271 + $0x20] sm:$0xff] %v1048
        %1065 = vst [vmem:[%s271 + $0x28] sm:$0xff] %v1049
        %1066 = vst [vmem:[%s271 + $0x30] sm:$0xff] %v1050
        %1067 = vst [vmem:[%s271 + $0x38] sm:$0xff] %v1051
        %1068 = vst [vmem:[%s271 + $0x40] sm:$0xff] %v1052
        %1069 = vst [vmem:[%s271 + $0x48] sm:$0xff] %v1053
        %1070 = vst [vmem:[%s271 + $0x50] sm:$0xff] %v1054
        %1071 = vst [vmem:[%s271 + $0x58] sm:$0xff] %v1055
        %1072 = vst [vmem:[%s271 + $0x60] sm:$0xff] %v1056
        %1073 = vst [vmem:[%s271 + $0x68] sm:$0xff] %v1057
        %1074 = vst [vmem:[%s271 + $0x70] sm:$0xff] %v1058
        %1075 = vst [vmem:[%s271 + $0x78] sm:$0xff] %v1059
        %s1076 = sand.u32 %s141, 1
        %s1077 = scalar_lea.sflag [#allocation4], %s1076
        %s1078 = sand.u32 %s141, 1
        %s1079 = smul.addr %s1078, 128
        %s1080 = scalar_lea.vmem [#allocation8], %s1079
        // Predicated region
        $region53: #{tpu_custom_call.1} parent=39 // pred_check
          %p1081 = pneg %p151
        $region54: #{tpu_custom_call.1} parent=39 // pred_check_branch
          %1083 = sbr.rel (%p1081) target = $region56
        $region55: #{tpu_custom_call.1} parent=39 // pred_region
          %s1084 = smul.u32 16, %s23
          %s1086 = ssub.s32 2048, 2048
          %1087 = vsyncadd %s1077, %s1086
          %s1088 = smul.addr %s1084, 128
          %s1089 = scalar_lea.hbm %s5, %s1088
          %s1090 = sshll.u32 %s1080, 4
          %s1091 = int_to_ptr.vmem [resolvable:$true] %s1090
          %1096 = dma.vmem_to_hbm [thread:$0]  %s1091, 2048, %s1089, %s1077, 128, 128, 8
        $region56: #{tpu_custom_call.1} parent=39 // pred_fallthru
          _
      $region40: #{tpu_custom_call.1} parent=5 // pred_fallthru
        _
      %p1097 = scmp.le.s32.totalorder 2, %s18
      // Predicated region
      $region57: #{tpu_custom_call.1} parent=5 // pred_check
        %p1098 = pneg %p1097
      $region58: #{tpu_custom_call.1} parent=5 // pred_check_branch
        %1100 = sbr.rel (%p1098) target = $region60
      $region59: #{tpu_custom_call.1} parent=5 // pred_region
        %s1101 = ssub.s32 %s18, 2
        // Predicated region
        $region61: #{tpu_custom_call.1} parent=59 // pred_check
          %p1102 = pneg %p157
        $region62: #{tpu_custom_call.1} parent=59 // pred_check_branch
          %1104 = sbr.rel (%p1102) target = $region64
        $region63: #{tpu_custom_call.1} parent=59 // pred_region
          %s1105 = sand.u32 %s142, 1
          %s1106 = scalar_lea.sflag [#allocation4], %s1105
          %s1107 = sand.u32 %s142, 1
          %s1108 = smul.addr %s1107, 128
          %s1109 = scalar_lea.vmem [#allocation8], %s1108
          %1110 = dma.done %s1106, 2048
        $region64: #{tpu_custom_call.1} parent=59 // pred_fallthru
          _
      $region60: #{tpu_custom_call.1} parent=5 // pred_fallthru
        _
    $region6: #{tpu_custom_call.1} parent=1 // loop_footer
      %s22 = sadd.s32 1, %s18
    $region7: #{tpu_custom_call.1} parent=1 // loop_footer_branch
      %17 = sbr.rel target = $region3
    $region8: #{tpu_custom_call.1} parent=1 // loop_exit
      _
    %1111 = vsyncpa [#allocation3], 1
    %s1112 = scalar_lea.sflag [#allocation3], 1
    %1113 = vsyncpa %s1112, 1
    %1114 = vsyncpa [#allocation6], 1
    %1115 = vsyncpa [#allocation4], 1
    %s1116 = scalar_lea.sflag [#allocation4], 1
    %1117 = vsyncpa %s1116, 1

</llo_original>
